<compile_context>
chip_gen: v7x
topology: tpu7x:2x2x1
jax: 0.10.0
libtpu: 0.0.40
codegen_flags: <defaults>
</compile_context>

<pallas_src>
import functools

import jax
import jax.numpy as jnp
from jax.experimental import pallas as pl
from jax.experimental.pallas import tpu as pltpu


def _round_up(n: int, m: int) -> int:
    return ((n + m - 1) // m) * m


def learn_images_kernel(x_ref, w1_ref, b1_ref, w2_ref, b2_ref, o_ref):
    # One batch tile per grid step; weights/biases (constant index_map) are resident
    # in VMEM across steps.
    w1 = w1_ref[...]                                     # (512, E)  f32 or bf16
    w2 = w2_ref[...]                                     # (E, E)    f32 or bf16
    x = x_ref[...].astype(w1.dtype)                      # (TM, 512) -> MXU operand dtype

    # Linear(512, emb_dim) + ReLU   (MXU matmul, f32 accumulation)
    h = jnp.dot(x, w1, preferred_element_type=jnp.float32)
    h = jnp.maximum(h + b1_ref[...], 0.0)

    # Linear(emb_dim, emb_dim) + Tanh
    z = jnp.dot(h.astype(w2.dtype), w2, preferred_element_type=jnp.float32)
    z = jnp.tanh(z + b2_ref[...])

    # Norm(): L2 normalize along dim=1 with clamp(min=1e-12) on the norm.
    # rsqrt on the (TM, 1) squared sum (EUP slot) + broadcast multiply instead of
    # sqrt + full-tile divide.  Clamp the *squared* sum at 1e-24 == (1e-12)^2.
    ss = jnp.sum(z * z, axis=1, keepdims=True)           # (TM, 1)
    inv = jax.lax.rsqrt(jnp.maximum(ss, 1e-24))
    o_ref[...] = (z * inv).astype(o_ref.dtype)


def learn_images(x, w1, b1, w2, b2, *, block_b: int = 2048,
                 compute_dtype=jnp.float32, out_dtype=jnp.float32):
    """LearnImages forward pass via a batch-tiled Pallas TPU kernel.

    x : (B, 512) f32 or bf16 (streamed as provided -- no wrapper cast).
    w1: (512, E), w2: (E, E), b1/b2: (1, E) or (E,).
    compute_dtype: MXU operand dtype (jnp.float32 or jnp.bfloat16); accumulation,
      biases and all elementwise math are always f32.
    out_dtype: dtype of the returned embeddings (f32 default, bf16 allowed).
    """
    B, in_dim = x.shape
    emb_dim = w1.shape[1]

    b1 = b1.reshape(1, emb_dim).astype(jnp.float32)
    b2 = b2.reshape(1, emb_dim).astype(jnp.float32)
    w1 = w1.astype(compute_dtype)
    w2 = w2.astype(compute_dtype)

    bf16_involved = (
        jnp.dtype(compute_dtype) == jnp.dtype(jnp.bfloat16)
        or x.dtype == jnp.dtype(jnp.bfloat16)
        or jnp.dtype(out_dtype) == jnp.dtype(jnp.bfloat16)
    )
    align = 16 if bf16_involved else 8

    # Batch tile: sublane-aligned, up to `block_b` rows per MXU matmul.
    # block_b default (2048) is a multiple of 256, keeping multi-step tiles 256-aligned.
    tm = min(block_b, _round_up(B, align))
    b_pad = _round_up(B, tm)
    if b_pad != B:
        x = jnp.pad(x, ((0, b_pad - B), (0, 0)))
    grid_b = b_pad // tm

    flops = 2 * b_pad * (in_dim * emb_dim + emb_dim * emb_dim) + 6 * b_pad * emb_dim
    transcendentals = b_pad * emb_dim + b_pad          # tanh + per-row rsqrt
    bytes_accessed = (
        x.size * x.dtype.itemsize
        + w1.size * w1.dtype.itemsize + w2.size * w2.dtype.itemsize
        + b1.size * 4 + b2.size * 4
        + b_pad * emb_dim * jnp.dtype(out_dtype).itemsize
    )

    vmem = pltpu.MemorySpace.VMEM

    # Small tiles + multi-step grid: a third x buffer (512 KiB-ish) hides DMA latency
    # behind the short per-tile compute.  Unnecessary (and skipped) for large tiles.
    x_spec_kwargs = {}
    if grid_b > 1 and tm < 1024:
        x_spec_kwargs["pipeline_mode"] = pl.Buffered(3)

    in_specs = [
        # Streamed per grid step (pipelined by Pallas).
        pl.BlockSpec((tm, in_dim), lambda i: (i, 0), memory_space=vmem,
                     **x_spec_kwargs),
        # Constant block index -> weights/biases stay VMEM-resident across steps.
        pl.BlockSpec((in_dim, emb_dim), lambda i: (0, 0), memory_space=vmem),
        pl.BlockSpec((1, emb_dim), lambda i: (0, 0), memory_space=vmem),
        pl.BlockSpec((emb_dim, emb_dim), lambda i: (0, 0), memory_space=vmem),
        pl.BlockSpec((1, emb_dim), lambda i: (0, 0), memory_space=vmem),
    ]
    out_spec = pl.BlockSpec((tm, emb_dim), lambda i: (i, 0), memory_space=vmem)

    def _call(dim_sem):
        return pl.pallas_call(
            learn_images_kernel,
            out_shape=jax.ShapeDtypeStruct((b_pad, emb_dim), out_dtype),
            grid=(grid_b,),
            in_specs=in_specs,
            out_specs=out_spec,
            compiler_params=pltpu.CompilerParams(
                dimension_semantics=(dim_sem,),
            ),
            cost_estimate=pl.CostEstimate(
                flops=flops,
                transcendentals=transcendentals,
                bytes_accessed=bytes_accessed,
            ),
        )(x, w1, b1, w2, b2)

    # On v7x, CORE_PARALLEL is what actually shards the batch grid across the 2
    # TensorCores.  Only request it when the grid splits evenly into >= 2 steps;
    # fall back to plain PARALLEL if this chip / jax build rejects it (no-op on
    # single-TC v5e/v6e either way).
    if grid_b >= 2 and grid_b % 2 == 0:
        try:
            out = _call(pltpu.CORE_PARALLEL)
        except Exception:
            out = _call(pltpu.PARALLEL)
    else:
        out = _call(pltpu.PARALLEL)

    return out[:B] if b_pad != B else out


def reference(x, w1, b1, w2, b2):
    x = x.astype(jnp.float32)
    h = jnp.maximum(x @ w1.astype(jnp.float32) + b1.reshape(1, -1), 0.0)
    z = jnp.tanh(h @ w2.astype(jnp.float32) + b2.reshape(1, -1))
    nrm = jnp.maximum(jnp.linalg.norm(z, ord=2, axis=1, keepdims=True), 1e-12)
    return z / nrm


if __name__ == "__main__":
    IN_DIM, EMB_DIM = 512, 128   # Linear(512, emb_dim); emb_dim lane-aligned (x128)

    key = jax.random.PRNGKey(0)
    kx, k1, kb1, k2, kb2 = jax.random.split(key, 5)

    # Deterministic synthetic parameters (PyTorch-style fan_in scaling).
    w1 = jax.random.uniform(k1, (IN_DIM, EMB_DIM), jnp.float32,
                            minval=-1.0, maxval=1.0) / jnp.sqrt(IN_DIM)
    b1 = jax.random.uniform(kb1, (1, EMB_DIM), jnp.float32,
                            minval=-1.0, maxval=1.0) / jnp.sqrt(IN_DIM)
    w2 = jax.random.uniform(k2, (EMB_DIM, EMB_DIM), jnp.float32,
                            minval=-1.0, maxval=1.0) / jnp.sqrt(EMB_DIM)
    b2 = jax.random.uniform(kb2, (1, EMB_DIM), jnp.float32,
                            minval=-1.0, maxval=1.0) / jnp.sqrt(EMB_DIM)

    # (batch, block_b, x dtype, MXU operand dtype, out dtype, atol)
    configs = [
        # single-tile path, batch padding (12 -> 16)
        (12, 2048, jnp.float32, jnp.float32, jnp.float32, 1e-5),
        # multi-step grid (2 x 256-row tiles): exercises CORE_PARALLEL / PARALLEL
        # fallback and the Buffered(3) x stream.
        (512, 256, jnp.float32, jnp.float32, jnp.float32, 1e-5),
        # bf16 MXU operands (f32 accumulation), single large tile.
        (512, 2048, jnp.float32, jnp.bfloat16, jnp.float32, 2e-2),
        # bf16 feature stream + bf16 output (halved HBM traffic path).
        (96, 2048, jnp.bfloat16, jnp.bfloat16, jnp.bfloat16, 3e-2),
    ]

    for B, blk, xdt, cdt, odt, atol in configs:
        x = jax.random.normal(jax.random.fold_in(kx, B), (B, IN_DIM),
                              jnp.float32).astype(xdt)
        fn = functools.partial(learn_images, block_b=blk,
                               compute_dtype=cdt, out_dtype=odt)
        out = jax.block_until_ready(fn(x, w1, b1, w2, b2))
        ref = reference(x, w1, b1, w2, b2)
        assert out.shape == (B, EMB_DIM), (out.shape, B, EMB_DIM)
        assert jnp.allclose(out.astype(jnp.float32), ref, atol=atol, rtol=1e-5), (
            f"mismatch vs reference (B={B}, block_b={blk}, x={xdt}, mxu={cdt}, out={odt})")

    print("KERNEL_OK")
</pallas_src>

<mosaic_0001>
module attributes {stable_mosaic.version = 11 : i64} {
  func.func @learn_images_kernel(%arg0: i32, %arg1: memref<16x512xf32, #tpu.memory_space<vmem>>, %arg2: memref<512x128xf32, #tpu.memory_space<vmem>>, %arg3: memref<1x128xf32, #tpu.memory_space<vmem>>, %arg4: memref<128x128xf32, #tpu.memory_space<vmem>>, %arg5: memref<1x128xf32, #tpu.memory_space<vmem>>, %arg6: memref<16x128xf32, #tpu.memory_space<vmem>>) attributes {dimension_semantics = [#tpu.dimension_semantics<parallel>], iteration_bounds = array<i64: 1>, scalar_prefetch = 0 : i64, scratch_operands = 0 : i64, tpu.core_type = #tpu.core_type<tc>, window_params = [{transform_indices = @transform_0, window_bounds = array<i64: 16, 512>}, {pipeline_mode = #tpu.pipeline_mode<synchronous>, transform_indices = @transform_1, window_bounds = array<i64: 512, 128>}, {pipeline_mode = #tpu.pipeline_mode<synchronous>, transform_indices = @transform_2, window_bounds = array<i64: 1, 128>}, {pipeline_mode = #tpu.pipeline_mode<synchronous>, transform_indices = @transform_3, window_bounds = array<i64: 128, 128>}, {pipeline_mode = #tpu.pipeline_mode<synchronous>, transform_indices = @transform_4, window_bounds = array<i64: 1, 128>}, {transform_indices = @transform_5, window_bounds = array<i64: 16, 128>}]} {
    %c0 = arith.constant 0 : index
    %c0_0 = arith.constant 0 : index
    %0 = vector.load %arg2[%c0, %c0_0] : memref<512x128xf32, #tpu.memory_space<vmem>>, vector<512x128xf32>
    %c0_1 = arith.constant 0 : index
    %c0_2 = arith.constant 0 : index
    %1 = vector.load %arg4[%c0_1, %c0_2] : memref<128x128xf32, #tpu.memory_space<vmem>>, vector<128x128xf32>
    %c0_3 = arith.constant 0 : index
    %c0_4 = arith.constant 0 : index
    %2 = vector.load %arg1[%c0_3, %c0_4] : memref<16x512xf32, #tpu.memory_space<vmem>>, vector<16x512xf32>
    %cst = arith.constant dense<0.000000e+00> : vector<16x128xf32>
    %3 = tpu.matmul %2, %0, %cst {dimension_numbers = #tpu.dot_dimension_numbers<[1], [0], [0], [1], [0, 0, 1, 1], [], []>} : vector<16x512xf32>, vector<512x128xf32>, vector<16x128xf32> -> vector<16x128xf32>
    %c0_5 = arith.constant 0 : index
    %c0_6 = arith.constant 0 : index
    %4 = vector.load %arg3[%c0_5, %c0_6] : memref<1x128xf32, #tpu.memory_space<vmem>>, vector<1x128xf32>
    %5 = vector.broadcast %4 : vector<1x128xf32> to vector<16x128xf32>
    %6 = arith.addf %3, %5 : vector<16x128xf32>
    %cst_7 = arith.constant 0.000000e+00 : f32
    %7 = vector.broadcast %cst_7 : f32 to vector<16x128xf32>
    %8 = arith.maximumf %6, %7 : vector<16x128xf32>
    %cst_8 = arith.constant dense<0.000000e+00> : vector<16x128xf32>
    %9 = tpu.matmul %8, %1, %cst_8 {dimension_numbers = #tpu.dot_dimension_numbers<[1], [0], [0], [1], [0, 0, 1, 1], [], []>} : vector<16x128xf32>, vector<128x128xf32>, vector<16x128xf32> -> vector<16x128xf32>
    %c0_9 = arith.constant 0 : index
    %c0_10 = arith.constant 0 : index
    %10 = vector.load %arg5[%c0_9, %c0_10] : memref<1x128xf32, #tpu.memory_space<vmem>>, vector<1x128xf32>
    %11 = vector.broadcast %10 : vector<1x128xf32> to vector<16x128xf32>
    %12 = arith.addf %9, %11 : vector<16x128xf32>
    %13 = math.tanh %12 : vector<16x128xf32>
    %14 = arith.mulf %13, %13 : vector<16x128xf32>
    %cst_11 = arith.constant dense<0.000000e+00> : vector<16xf32>
    %15 = vector.multi_reduction <add>, %14, %cst_11 [1] : vector<16x128xf32> to vector<16xf32>
    %16 = vector.shape_cast %15 : vector<16xf32> to vector<16x1xf32>
    %cst_12 = arith.constant 1.000000e-24 : f32
    %17 = vector.broadcast %cst_12 : f32 to vector<16x1xf32>
    %18 = arith.maximumf %16, %17 : vector<16x1xf32>
    %19 = math.rsqrt %18 : vector<16x1xf32>
    %20 = vector.broadcast %19 : vector<16x1xf32> to vector<16x128xf32>
    %21 = arith.mulf %13, %20 : vector<16x128xf32>
    %c0_13 = arith.constant 0 : index
    %c0_14 = arith.constant 0 : index
    %22 = vector.load %arg6[%c0_13, %c0_14] : memref<16x128xf32, #tpu.memory_space<vmem>>, vector<16x128xf32>
    tpu.vector_store %arg6[%c0_13, %c0_14], %21 {strides = array<i32>} : memref<16x128xf32, #tpu.memory_space<vmem>>, vector<16x128xf32>,
    return
  }
  func.func @transform_0(%arg0: i32) -> (i32, i32) {
    %c0_i32 = arith.constant 0 : i32
    %c0_i32_0 = arith.constant 0 : i32
    return %arg0, %c0_i32 : i32, i32
  }
  func.func @transform_1(%arg0: i32) -> (i32, i32) {
    %c0_i32 = arith.constant 0 : i32
    %c0_i32_0 = arith.constant 0 : i32
    %c0_i32_1 = arith.constant 0 : i32
    return %c0_i32, %c0_i32_0 : i32, i32
  }
  func.func @transform_2(%arg0: i32) -> (i32, i32) {
    %c0_i32 = arith.constant 0 : i32
    %c0_i32_0 = arith.constant 0 : i32
    %c0_i32_1 = arith.constant 0 : i32
    return %c0_i32, %c0_i32_0 : i32, i32
  }
  func.func @transform_3(%arg0: i32) -> (i32, i32) {
    %c0_i32 = arith.constant 0 : i32
    %c0_i32_0 = arith.constant 0 : i32
    %c0_i32_1 = arith.constant 0 : i32
    return %c0_i32, %c0_i32_0 : i32, i32
  }
  func.func @transform_4(%arg0: i32) -> (i32, i32) {
    %c0_i32 = arith.constant 0 : i32
    %c0_i32_0 = arith.constant 0 : i32
    %c0_i32_1 = arith.constant 0 : i32
    return %c0_i32, %c0_i32_0 : i32, i32
  }
  func.func @transform_5(%arg0: i32) -> (i32, i32) {
    %c0_i32 = arith.constant 0 : i32
    %c0_i32_0 = arith.constant 0 : i32
    return %arg0, %c0_i32 : i32, i32
  }
}

</mosaic_0001>

<llo_original>
// kernel: tpu_custom_call.1
$region0: #{tpu_custom_call.1}
  #allocation0 [shape = 'u32[]', space=smem, size = 0x4, offset = 0x4, fixed_abs, tag = 'smem constant byte address 0x4 - core index']
  #allocation1 [shape = 'u32[144,128]{1,0:T(1,128)}', space=vmem, size = 0x12000, scoped, tag = 'internal scratch']
  %s0 = inlined_call_operand.hbm [shape: f32[16,512], index: 0, kind: input, shape index: {}]
  %s1 = inlined_call_operand.hbm [shape: f32[512,128], index: 1, kind: input, shape index: {}]
  %s2 = inlined_call_operand.vmem [shape: f32[1,128], index: 2, kind: input, shape index: {}]
  %s3 = inlined_call_operand.hbm [shape: f32[128,128], index: 3, kind: input, shape index: {}]
  %s4 = inlined_call_operand.vmem [shape: f32[1,128], index: 4, kind: input, shape index: {}]
  %s5 = inlined_call_operand.hbm [shape: f32[16,128], index: 5, kind: output, shape index: {}]
  %s6 = sld [smem:[#allocation0]]
  $region42: #{tpu_custom_call.1} parent=0
    _
  %s8 = ssub.s32 1, %s6
  %s9 = scalar_select 0, %s8, %s6
  $region1: #{tpu_custom_call.1} parent=0
    #allocation2 [shape = 'u8[32768]{0}', space=vmem, size = 0x8000, scoped, tag = 'input window, operand 0, single buffered']
    #allocation3 [shape = 's32[1]{0}', space=sflag, size = 0x4, scoped, tag = 'scoped memory for tpu_custom_call.1']
    #allocation4 [shape = 's32[1]{0}', space=sflag, size = 0x4, scoped, tag = 'scoped memory for tpu_custom_call.1']
    #allocation5 [shape = 'u8[262144]{0}', space=vmem, size = 0x40000, scoped, tag = 'input window, operand 1, single buffered']
    #allocation6 [shape = 's32[1]{0}', space=sflag, size = 0x4, scoped, tag = 'scoped memory for tpu_custom_call.1']
    #allocation7 [shape = 'u8[65536]{0}', space=vmem, size = 0x10000, scoped, tag = 'input window, operand 3, single buffered']
    #allocation8 [shape = 'u8[8192]{0}', space=vmem, size = 0x2000, scoped, tag = 'output window, operand 0, single buffered']
    %10 = vsyncpa [#allocation3], 0
    %11 = vsyncpa [#allocation6], 0
    %12 = vsyncpa [#allocation4], 0
    // Predicated region
    $region2: #{tpu_custom_call.1} parent=1 // pred_check
      _
    $region3: #{tpu_custom_call.1} parent=1 // pred_check_branch
      %14 = sbr.rel (0) target = $region5
    $region4: #{tpu_custom_call.1} parent=1 // pred_region
      %s16 = ssub.s32 1024, 1024
      %17 = vsyncadd [#allocation3], %s16
      %s18 = sshll.u32 [#allocation2], 4
      %s19 = int_to_ptr.vmem [resolvable:$true] %s18
      %24 = dma.hbm_to_vmem [thread:$0]  %s0, 1024, %s19, [#allocation3], 512, 512, 32
    $region5: #{tpu_custom_call.1} parent=1 // pred_fallthru
      _
    // Predicated region
    $region6: #{tpu_custom_call.1} parent=1 // pred_check
      _
    $region7: #{tpu_custom_call.1} parent=1 // pred_check_branch
      %26 = sbr.rel (0) target = $region9
    $region8: #{tpu_custom_call.1} parent=1 // pred_region
      %s28 = ssub.s32 8192, 8192
      %29 = vsyncadd [#allocation6], %s28
      %s30 = sshll.u32 [#allocation5], 4
      %s31 = int_to_ptr.vmem [resolvable:$true] %s30
      %36 = dma.hbm_to_vmem [thread:$0]  %s1, 8192, %s31, [#allocation6], 128, 128, 8
    $region9: #{tpu_custom_call.1} parent=1 // pred_fallthru
      _
    // Predicated region
    $region10: #{tpu_custom_call.1} parent=1 // pred_check
      _
    $region11: #{tpu_custom_call.1} parent=1 // pred_check_branch
      %38 = sbr.rel (0) target = $region13
    $region12: #{tpu_custom_call.1} parent=1 // pred_region
      _
    $region13: #{tpu_custom_call.1} parent=1 // pred_fallthru
      _
    // Predicated region
    $region14: #{tpu_custom_call.1} parent=1 // pred_check
      _
    $region15: #{tpu_custom_call.1} parent=1 // pred_check_branch
      %40 = sbr.rel (0) target = $region17
    $region16: #{tpu_custom_call.1} parent=1 // pred_region
      %s42 = ssub.s32 2048, 2048
      %43 = vsyncadd [#allocation6], %s42
      %s44 = sshll.u32 [#allocation7], 4
      %s45 = int_to_ptr.vmem [resolvable:$true] %s44
      %50 = dma.hbm_to_vmem [thread:$0]  %s3, 2048, %s45, [#allocation6], 128, 128, 8
    $region17: #{tpu_custom_call.1} parent=1 // pred_fallthru
      _
    // Predicated region
    $region18: #{tpu_custom_call.1} parent=1 // pred_check
      _
    $region19: #{tpu_custom_call.1} parent=1 // pred_check_branch
      %52 = sbr.rel (0) target = $region21
    $region20: #{tpu_custom_call.1} parent=1 // pred_region
      _
    $region21: #{tpu_custom_call.1} parent=1 // pred_fallthru
      _
    // Predicated region
    $region22: #{tpu_custom_call.1} parent=1 // pred_check
      _
    $region23: #{tpu_custom_call.1} parent=1 // pred_check_branch
      %54 = sbr.rel (0) target = $region25
    $region24: #{tpu_custom_call.1} parent=1 // pred_region
      %55 = dma.done [#allocation3], 1024
    $region25: #{tpu_custom_call.1} parent=1 // pred_fallthru
      _
    // Predicated region
    $region26: #{tpu_custom_call.1} parent=1 // pred_check
      _
    $region27: #{tpu_custom_call.1} parent=1 // pred_check_branch
      %57 = sbr.rel (0) target = $region29
    $region28: #{tpu_custom_call.1} parent=1 // pred_region
      %58 = dma.done [#allocation6], 8192
    $region29: #{tpu_custom_call.1} parent=1 // pred_fallthru
      _
    // Predicated region
    $region30: #{tpu_custom_call.1} parent=1 // pred_check
      _
    $region31: #{tpu_custom_call.1} parent=1 // pred_check_branch
      %60 = sbr.rel (0) target = $region33
    $region32: #{tpu_custom_call.1} parent=1 // pred_region
      %61 = dma.done [#allocation6], 2048
    $region33: #{tpu_custom_call.1} parent=1 // pred_fallthru
      _
    %v62 = vld [vmem:[#allocation5] sm:$0xff]
    %v63 = vld [vmem:[#allocation5 + $0x8] sm:$0xff]
    %v64 = vld [vmem:[#allocation5 + $0x10] sm:$0xff]
    %v65 = vld [vmem:[#allocation5 + $0x18] sm:$0xff]
    %v66 = vld [vmem:[#allocation5 + $0x20] sm:$0xff]
    %v67 = vld [vmem:[#allocation5 + $0x28] sm:$0xff]
    %v68 = vld [vmem:[#allocation5 + $0x30] sm:$0xff]
    %v69 = vld [vmem:[#allocation5 + $0x38] sm:$0xff]
    %v70 = vld [vmem:[#allocation5 + $0x40] sm:$0xff]
    %v71 = vld [vmem:[#allocation5 + $0x48] sm:$0xff]
    %v72 = vld [vmem:[#allocation5 + $0x50] sm:$0xff]
    %v73 = vld [vmem:[#allocation5 + $0x58] sm:$0xff]
    %v74 = vld [vmem:[#allocation5 + $0x60] sm:$0xff]
    %v75 = vld [vmem:[#allocation5 + $0x68] sm:$0xff]
    %v76 = vld [vmem:[#allocation5 + $0x70] sm:$0xff]
    %v77 = vld [vmem:[#allocation5 + $0x78] sm:$0xff]
    %v78 = vld [vmem:[#allocation5 + $0x80] sm:$0xff]
    %v79 = vld [vmem:[#allocation5 + $0x88] sm:$0xff]
    %v80 = vld [vmem:[#allocation5 + $0x90] sm:$0xff]
    %v81 = vld [vmem:[#allocation5 + $0x98] sm:$0xff]
    %v82 = vld [vmem:[#allocation5 + $0xa0] sm:$0xff]
    %v83 = vld [vmem:[#allocation5 + $0xa8] sm:$0xff]
    %v84 = vld [vmem:[#allocation5 + $0xb0] sm:$0xff]
    %v85 = vld [vmem:[#allocation5 + $0xb8] sm:$0xff]
    %v86 = vld [vmem:[#allocation5 + $0xc0] sm:$0xff]
    %v87 = vld [vmem:[#allocation5 + $0xc8] sm:$0xff]
    %v88 = vld [vmem:[#allocation5 + $0xd0] sm:$0xff]
    %v89 = vld [vmem:[#allocation5 + $0xd8] sm:$0xff]
    %v90 = vld [vmem:[#allocation5 + $0xe0] sm:$0xff]
    %v91 = vld [vmem:[#allocation5 + $0xe8] sm:$0xff]
    %v92 = vld [vmem:[#allocation5 + $0xf0] sm:$0xff]
    %v93 = vld [vmem:[#allocation5 + $0xf8] sm:$0xff]
    %v94 = vld [vmem:[#allocation5 + $0x100] sm:$0xff]
    %v95 = vld [vmem:[#allocation5 + $0x108] sm:$0xff]
    %v96 = vld [vmem:[#allocation5 + $0x110] sm:$0xff]
    %v97 = vld [vmem:[#allocation5 + $0x118] sm:$0xff]
    %v98 = vld [vmem:[#allocation5 + $0x120] sm:$0xff]
    %v99 = vld [vmem:[#allocation5 + $0x128] sm:$0xff]
    %v100 = vld [vmem:[#allocation5 + $0x130] sm:$0xff]
    %v101 = vld [vmem:[#allocation5 + $0x138] sm:$0xff]
    %v102 = vld [vmem:[#allocation5 + $0x140] sm:$0xff]
    %v103 = vld [vmem:[#allocation5 + $0x148] sm:$0xff]
    %v104 = vld [vmem:[#allocation5 + $0x150] sm:$0xff]
    %v105 = vld [vmem:[#allocation5 + $0x158] sm:$0xff]
    %v106 = vld [vmem:[#allocation5 + $0x160] sm:$0xff]
    %v107 = vld [vmem:[#allocation5 + $0x168] sm:$0xff]
    %v108 = vld [vmem:[#allocation5 + $0x170] sm:$0xff]
    %v109 = vld [vmem:[#allocation5 + $0x178] sm:$0xff]
    %v110 = vld [vmem:[#allocation5 + $0x180] sm:$0xff]
    %v111 = vld [vmem:[#allocation5 + $0x188] sm:$0xff]
    %v112 = vld [vmem:[#allocation5 + $0x190] sm:$0xff]
    %v113 = vld [vmem:[#allocation5 + $0x198] sm:$0xff]
    %v114 = vld [vmem:[#allocation5 + $0x1a0] sm:$0xff]
    %v115 = vld [vmem:[#allocation5 + $0x1a8] sm:$0xff]
    %v116 = vld [vmem:[#allocation5 + $0x1b0] sm:$0xff]
    %v117 = vld [vmem:[#allocation5 + $0x1b8] sm:$0xff]
    %v118 = vld [vmem:[#allocation5 + $0x1c0] sm:$0xff]
    %v119 = vld [vmem:[#allocation5 + $0x1c8] sm:$0xff]
    %v120 = vld [vmem:[#allocation5 + $0x1d0] sm:$0xff]
    %v121 = vld [vmem:[#allocation5 + $0x1d8] sm:$0xff]
    %v122 = vld [vmem:[#allocation5 + $0x1e0] sm:$0xff]
    %v123 = vld [vmem:[#allocation5 + $0x1e8] sm:$0xff]
    %v124 = vld [vmem:[#allocation5 + $0x1f0] sm:$0xff]
    %v125 = vld [vmem:[#allocation5 + $0x1f8] sm:$0xff]
    %v126 = vld [vmem:[#allocation7] sm:$0xff]
    %v127 = vld [vmem:[#allocation7 + $0x8] sm:$0xff]
    %v128 = vld [vmem:[#allocation7 + $0x10] sm:$0xff]
    %v129 = vld [vmem:[#allocation7 + $0x18] sm:$0xff]
    %v130 = vld [vmem:[#allocation7 + $0x20] sm:$0xff]
    %v131 = vld [vmem:[#allocation7 + $0x28] sm:$0xff]
    %v132 = vld [vmem:[#allocation7 + $0x30] sm:$0xff]
    %v133 = vld [vmem:[#allocation7 + $0x38] sm:$0xff]
    %v134 = vld [vmem:[#allocation7 + $0x40] sm:$0xff]
    %v135 = vld [vmem:[#allocation7 + $0x48] sm:$0xff]
    %v136 = vld [vmem:[#allocation7 + $0x50] sm:$0xff]
    %v137 = vld [vmem:[#allocation7 + $0x58] sm:$0xff]
    %v138 = vld [vmem:[#allocation7 + $0x60] sm:$0xff]
    %v139 = vld [vmem:[#allocation7 + $0x68] sm:$0xff]
    %v140 = vld [vmem:[#allocation7 + $0x70] sm:$0xff]
    %v141 = vld [vmem:[#allocation7 + $0x78] sm:$0xff]
    %v142 = vld [vmem:[#allocation2] sm:$0xff]
    %v143 = vld [vmem:[#allocation2 + $0x8] sm:$0xff]
    %v144 = vld [vmem:[#allocation2 + $0x10] sm:$0xff]
    %v145 = vld [vmem:[#allocation2 + $0x18] sm:$0xff]
    %v146 = vld [vmem:[#allocation2 + $0x20] sm:$0xff]
    %v147 = vld [vmem:[#allocation2 + $0x28] sm:$0xff]
    %v148 = vld [vmem:[#allocation2 + $0x30] sm:$0xff]
    %v149 = vld [vmem:[#allocation2 + $0x38] sm:$0xff]
    %v150 = vld [vmem:[%s2] sm:$0x1]
    %v152 = vlaneseq
    %v153 = vshrl.u32 %v152, 7
    %v154 = vsub.s32 0, %v153
    %v155 = vrot.slane %v150, %v154
    %157 = vmatprep.subr.mxu0 0.0
    %158 = vmatpush1.msra.mxu0 %v62
    %159 = vmatprep.subr.mxu0 0.0
    %160 = vmatpush1.msra.mxu0 %v63
    %161 = vmatprep.subr.mxu0 0.0
    %162 = vmatpush1.msra.mxu0 %v64
    %163 = vmatprep.subr.mxu0 0.0
    %164 = vmatpush1.msra.mxu0 %v65
    %165 = vmatprep.subr.mxu0 0.0
    %166 = vmatpush1.msra.mxu0 %v66
    %167 = vmatprep.subr.mxu0 0.0
    %168 = vmatpush1.msra.mxu0 %v67
    %169 = vmatprep.subr.mxu0 0.0
    %170 = vmatpush1.msra.mxu0 %v68
    %171 = vmatprep.subr.mxu0 0.0
    %172 = vmatpush1.msra.mxu0 %v69
    %173 = vmatprep.subr.mxu0 0.0
    %174 = vmatpush1.msra.mxu0 %v70
    %175 = vmatprep.subr.mxu0 0.0
    %176 = vmatpush1.msra.mxu0 %v71
    %177 = vmatprep.subr.mxu0 0.0
    %178 = vmatpush1.msra.mxu0 %v72
    %179 = vmatprep.subr.mxu0 0.0
    %180 = vmatpush1.msra.mxu0 %v73
    %181 = vmatprep.subr.mxu0 0.0
    %182 = vmatpush1.msra.mxu0 %v74
    %183 = vmatprep.subr.mxu0 0.0
    %184 = vmatpush1.msra.mxu0 %v75
    %185 = vmatprep.subr.mxu0 0.0
    %186 = vmatpush1.msra.mxu0 %v76
    %187 = vmatprep.subr.mxu0 0.0
    %188 = vmatpush1.msra.mxu0 %v77
    %189 = vmatprep.subr.mxu0 0.0
    %190 = vmatpush1.msra.mxu0 %v78
    %191 = vmatprep.subr.mxu0 0.0
    %192 = vmatpush1.msra.mxu0 %v79
    %193 = vmatprep.subr.mxu0 0.0
    %194 = vmatpush1.msra.mxu0 %v80
    %195 = vmatprep.subr.mxu0 0.0
    %196 = vmatpush1.msra.mxu0 %v81
    %197 = vmatprep.subr.mxu0 0.0
    %198 = vmatpush1.msra.mxu0 %v82
    %199 = vmatprep.subr.mxu0 0.0
    %200 = vmatpush1.msra.mxu0 %v83
    %201 = vmatprep.subr.mxu0 0.0
    %202 = vmatpush1.msra.mxu0 %v84
    %203 = vmatprep.subr.mxu0 0.0
    %204 = vmatpush1.msra.mxu0 %v85
    %205 = vmatprep.subr.mxu0 0.0
    %206 = vmatpush1.msra.mxu0 %v86
    %207 = vmatprep.subr.mxu0 0.0
    %208 = vmatpush1.msra.mxu0 %v87
    %209 = vmatprep.subr.mxu0 0.0
    %210 = vmatpush1.msra.mxu0 %v88
    %211 = vmatprep.subr.mxu0 0.0
    %212 = vmatpush1.msra.mxu0 %v89
    %213 = vmatprep.subr.mxu0 0.0
    %214 = vmatpush1.msra.mxu0 %v90
    %215 = vmatprep.subr.mxu0 0.0
    %216 = vmatpush1.msra.mxu0 %v91
    %217 = vmatprep.subr.mxu0 0.0
    %218 = vmatpush1.msra.mxu0 %v92
    %219 = vmatprep.subr.mxu0 0.0
    %220 = vmatpush1.msra.mxu0 %v93
    %221 = vmatprep.mubr.f32.mxu0 %v143
    %222 = vmatmul.mubr.f32.gmra.mrb[0].mxu0 %v142
    %v223 = vpop.f32.mrb[0].mxu0
    %v224 = vadd.f32 %v155, %v223
    %v225 = vpop.f32.mrb[0].mxu0
    %226 = vmatprep.mubr.f32.mxu0 %v147
    %227 = vmatmul.mubr.f32.gmra.mrb[0].mxu0 %v146
    %v228 = vpop.f32.mrb[0].mxu0
    %v229 = vadd.f32 %v155, %v228
    %v230 = vpop.f32.mrb[0].mxu0
    %231 = vdwg.mxu0
    %232 = vmatprep.subr.mxu0 0.0
    %233 = vmatpush1.msra.mxu0 %v94
    %234 = vmatprep.subr.mxu0 0.0
    %235 = vmatpush1.msra.mxu0 %v95
    %236 = vmatprep.subr.mxu0 0.0
    %237 = vmatpush1.msra.mxu0 %v96
    %238 = vmatprep.subr.mxu0 0.0
    %239 = vmatpush1.msra.mxu0 %v97
    %240 = vmatprep.subr.mxu0 0.0
    %241 = vmatpush1.msra.mxu0 %v98
    %242 = vmatprep.subr.mxu0 0.0
    %243 = vmatpush1.msra.mxu0 %v99
    %244 = vmatprep.subr.mxu0 0.0
    %245 = vmatpush1.msra.mxu0 %v100
    %246 = vmatprep.subr.mxu0 0.0
    %247 = vmatpush1.msra.mxu0 %v101
    %248 = vmatprep.subr.mxu0 0.0
    %249 = vmatpush1.msra.mxu0 %v102
    %250 = vmatprep.subr.mxu0 0.0
    %251 = vmatpush1.msra.mxu0 %v103
    %252 = vmatprep.subr.mxu0 0.0
    %253 = vmatpush1.msra.mxu0 %v104
    %254 = vmatprep.subr.mxu0 0.0
    %255 = vmatpush1.msra.mxu0 %v105
    %256 = vmatprep.subr.mxu0 0.0
    %257 = vmatpush1.msra.mxu0 %v106
    %258 = vmatprep.subr.mxu0 0.0
    %259 = vmatpush1.msra.mxu0 %v107
    %260 = vmatprep.subr.mxu0 0.0
    %261 = vmatpush1.msra.mxu0 %v108
    %262 = vmatprep.subr.mxu0 0.0
    %263 = vmatpush1.msra.mxu0 %v109
    %264 = vmatprep.subr.mxu0 0.0
    %265 = vmatpush1.msra.mxu0 %v110
    %266 = vmatprep.subr.mxu0 0.0
    %267 = vmatpush1.msra.mxu0 %v111
    %268 = vmatprep.subr.mxu0 0.0
    %269 = vmatpush1.msra.mxu0 %v112
    %270 = vmatprep.subr.mxu0 0.0
    %271 = vmatpush1.msra.mxu0 %v113
    %272 = vmatprep.subr.mxu0 0.0
    %273 = vmatpush1.msra.mxu0 %v114
    %274 = vmatprep.subr.mxu0 0.0
    %275 = vmatpush1.msra.mxu0 %v115
    %276 = vmatprep.subr.mxu0 0.0
    %277 = vmatpush1.msra.mxu0 %v116
    %278 = vmatprep.subr.mxu0 0.0
    %279 = vmatpush1.msra.mxu0 %v117
    %280 = vmatprep.subr.mxu0 0.0
    %281 = vmatpush1.msra.mxu0 %v118
    %282 = vmatprep.subr.mxu0 0.0
    %283 = vmatpush1.msra.mxu0 %v119
    %284 = vmatprep.subr.mxu0 0.0
    %285 = vmatpush1.msra.mxu0 %v120
    %286 = vmatprep.subr.mxu0 0.0
    %287 = vmatpush1.msra.mxu0 %v121
    %288 = vmatprep.subr.mxu0 0.0
    %289 = vmatpush1.msra.mxu0 %v122
    %290 = vmatprep.subr.mxu0 0.0
    %291 = vmatpush1.msra.mxu0 %v123
    %292 = vmatprep.subr.mxu0 0.0
    %293 = vmatpush1.msra.mxu0 %v124
    %294 = vmatprep.subr.mxu0 0.0
    %295 = vmatpush1.msra.mxu0 %v125
    %296 = vmatprep.mubr.f32.mxu0 %v145
    %297 = vmatmul.mubr.f32.gmra.mrb[0].mxu0 %v144
    %v298 = vpop.f32.mrb[0].mxu0
    %v299 = vadd.f32 %v224, %v298
    %v300 = vpop.f32.mrb[0].mxu0
    %301 = vmatprep.mubr.f32.mxu0 %v149
    %302 = vmatmul.mubr.f32.gmra.mrb[0].mxu0 %v148
    %v303 = vpop.f32.mrb[0].mxu0
    %v304 = vadd.f32 %v229, %v303
    %v305 = vpop.f32.mrb[0].mxu0
    %306 = vdwg.mxu0
    %v307 = vmax.f32 %v299, 0.0
    %v308 = vmax.f32 %v304, 0.0
    %v309 = vld [vmem:[%s4] sm:$0x1]
    %v311 = vlaneseq
    %v312 = vshrl.u32 %v311, 7
    %v313 = vsub.s32 0, %v312
    %v314 = vrot.slane %v309, %v313
    %316 = vmatprep.subr.mxu0 0.0
    %317 = vmatpush1.msra.mxu0 %v126
    %318 = vmatprep.subr.mxu0 0.0
    %319 = vmatpush1.msra.mxu0 %v127
    %320 = vmatprep.subr.mxu0 0.0
    %321 = vmatpush1.msra.mxu0 %v128
    %322 = vmatprep.subr.mxu0 0.0
    %323 = vmatpush1.msra.mxu0 %v129
    %324 = vmatprep.subr.mxu0 0.0
    %325 = vmatpush1.msra.mxu0 %v130
    %326 = vmatprep.subr.mxu0 0.0
    %327 = vmatpush1.msra.mxu0 %v131
    %328 = vmatprep.subr.mxu0 0.0
    %329 = vmatpush1.msra.mxu0 %v132
    %330 = vmatprep.subr.mxu0 0.0
    %331 = vmatpush1.msra.mxu0 %v133
    %332 = vmatprep.subr.mxu0 0.0
    %333 = vmatpush1.msra.mxu0 %v134
    %334 = vmatprep.subr.mxu0 0.0
    %335 = vmatpush1.msra.mxu0 %v135
    %336 = vmatprep.subr.mxu0 0.0
    %337 = vmatpush1.msra.mxu0 %v136
    %338 = vmatprep.subr.mxu0 0.0
    %339 = vmatpush1.msra.mxu0 %v137
    %340 = vmatprep.subr.mxu0 0.0
    %341 = vmatpush1.msra.mxu0 %v138
    %342 = vmatprep.subr.mxu0 0.0
    %343 = vmatpush1.msra.mxu0 %v139
    %344 = vmatprep.subr.mxu0 0.0
    %345 = vmatpush1.msra.mxu0 %v140
    %346 = vmatprep.subr.mxu0 0.0
    %347 = vmatpush1.msra.mxu0 %v141
    %348 = vmatprep.subr.mxu0 0.0
    %349 = vmatpush1.msra.mxu0 0.0
    %350 = vmatprep.subr.mxu0 0.0
    %351 = vmatpush1.msra.mxu0 0.0
    %352 = vmatprep.subr.mxu0 0.0
    %353 = vmatpush1.msra.mxu0 0.0
    %354 = vmatprep.subr.mxu0 0.0
    %355 = vmatpush1.msra.mxu0 0.0
    %356 = vmatprep.subr.mxu0 0.0
    %357 = vmatpush1.msra.mxu0 0.0
    %358 = vmatprep.subr.mxu0 0.0
    %359 = vmatpush1.msra.mxu0 0.0
    %360 = vmatprep.subr.mxu0 0.0
    %361 = vmatpush1.msra.mxu0 0.0
    %362 = vmatprep.subr.mxu0 0.0
    %363 = vmatpush1.msra.mxu0 0.0
    %364 = vmatprep.subr.mxu0 0.0
    %365 = vmatpush1.msra.mxu0 0.0
    %366 = vmatprep.subr.mxu0 0.0
    %367 = vmatpush1.msra.mxu0 0.0
    %368 = vmatprep.subr.mxu0 0.0
    %369 = vmatpush1.msra.mxu0 0.0
    %370 = vmatprep.subr.mxu0 0.0
    %371 = vmatpush1.msra.mxu0 0.0
    %372 = vmatprep.subr.mxu0 0.0
    %373 = vmatpush1.msra.mxu0 0.0
    %374 = vmatprep.subr.mxu0 0.0
    %375 = vmatpush1.msra.mxu0 0.0
    %376 = vmatprep.subr.mxu0 0.0
    %377 = vmatpush1.msra.mxu0 0.0
    %378 = vmatprep.subr.mxu0 0.0
    %379 = vmatpush1.msra.mxu0 0.0
    %380 = vmatprep.mubr.f32.mxu0 0.0
    %381 = vmatmul.mubr.f32.gmra.mrb[0].mxu0 %v307
    %v382 = vpop.f32.mrb[0].mxu0
    %v383 = vadd.f32 %v314, %v382
    %v384 = vpop.f32.mrb[0].mxu0
    %385 = vmatprep.mubr.f32.mxu0 0.0
    %386 = vmatmul.mubr.f32.gmra.mrb[0].mxu0 %v308
    %v387 = vpop.f32.mrb[0].mxu0
    %v388 = vadd.f32 %v314, %v387
    %v389 = vpop.f32.mrb[0].mxu0
    %390 = vdwg.mxu0
    %v391 = vtanh.pop %v383
    %v392 = vtanh.pop %v388
    %v393 = vmul.f32 %v391, %v391
    %v394 = vmul.f32 %v392, %v392
    %395 = vadd.xlane.f32.xlu0 %v393
    %v396 = vpop.xlane.xlu0 %395
    %397 = vadd.xlane.f32.xlu0 %v394
    %v398 = vpop.xlane.xlu0 %397
    %v399 = vmax.f32 %v396, 1e-24
    %v400 = vmax.f32 %v398, 1e-24
    %v401 = vrsqrt.pop %v399
    %v402 = vrsqrt.pop %v400
    %v403 = vmul.f32 %v391, %v401
    %v404 = vmul.f32 %v392, %v402
    %405 = vst [vmem:[#allocation8] sm:$0xff] %v403
    %406 = vst [vmem:[#allocation8 + $0x8] sm:$0xff] %v404
    // Predicated region
    $region34: #{tpu_custom_call.1} parent=1 // pred_check
      _
    $region35: #{tpu_custom_call.1} parent=1 // pred_check_branch
      %408 = sbr.rel (0) target = $region37
    $region36: #{tpu_custom_call.1} parent=1 // pred_region
      %s410 = ssub.s32 256, 256
      %411 = vsyncadd [#allocation4], %s410
      %s412 = sshll.u32 [#allocation8], 4
      %s413 = int_to_ptr.vmem [resolvable:$true] %s412
      %418 = dma.vmem_to_hbm [thread:$0]  %s413, 256, %s5, [#allocation4], 128, 128, 8
    $region37: #{tpu_custom_call.1} parent=1 // pred_fallthru
      _
    // Predicated region
    $region38: #{tpu_custom_call.1} parent=1 // pred_check
      _
    $region39: #{tpu_custom_call.1} parent=1 // pred_check_branch
      %420 = sbr.rel (0) target = $region41
    $region40: #{tpu_custom_call.1} parent=1 // pred_region
      %421 = dma.done [#allocation4], 256
    $region41: #{tpu_custom_call.1} parent=1 // pred_fallthru
      _
    %422 = vsyncpa [#allocation3], 1
    %423 = vsyncpa [#allocation6], 1
    %424 = vsyncpa [#allocation4], 1

</llo_original>
